<compile_context>
chip_gen: v5e
topology: v5e:2x2
jax: 0.10.0
libtpu: 0.0.40
codegen_flags: <defaults>
</compile_context>

<pallas_src>
import jax
import jax.numpy as jnp
from jax.experimental import pallas as pl
from jax.experimental.pallas import tpu as pltpu


# ---------------------------------------------------------------------------
# Primary path: the optimal "kernel" for Identity is no kernel at all.
# ---------------------------------------------------------------------------
def identity(x: jax.Array) -> jax.Array:
    """Identity forward pass. Returning x directly is strictly fastest."""
    return x


# ---------------------------------------------------------------------------
# Aliased Pallas pass-through (for callers that must route through a Pallas
# custom call).  Zero-copy only when the caller donates the input buffer.
# ---------------------------------------------------------------------------
def _identity_alias_kernel(x_ref, o_ref):
    # Output HBM buffer is aliased to the input; nothing to do.
    del x_ref, o_ref


def identity_aliased(x: jax.Array) -> jax.Array:
    if x.size == 0:
        return x
    return pl.pallas_call(
        _identity_alias_kernel,
        out_shape=jax.ShapeDtypeStruct(x.shape, x.dtype),
        in_specs=[pl.BlockSpec(memory_space=pl.ANY)],
        out_specs=pl.BlockSpec(memory_space=pl.ANY),
        input_output_aliases={0: 0},
    )(x)


# ---------------------------------------------------------------------------
# Copy path: fresh output buffer via direct HBM->HBM DMA.
# ---------------------------------------------------------------------------
def _make_hbm_copy_kernel(bounds):
    """Build a kernel that copies x_ref -> o_ref with len(bounds)-1 DMAs.

    `bounds` are static Python ints: chunk boundaries along axis 0.  All DMAs
    are started first (so the DMA engines stream concurrently), then waited.
    """
    n = len(bounds) - 1

    def kernel(x_ref, o_ref, sems):
        copies = []
        for i in range(n):
            lo, hi = bounds[i], bounds[i + 1]
            cp = pltpu.make_async_copy(
                x_ref.at[pl.ds(lo, hi - lo)],
                o_ref.at[pl.ds(lo, hi - lo)],
                sems.at[i],
            )
            cp.start()
            copies.append(cp)
        for cp in copies:
            cp.wait()

    return kernel, n


def identity_copy(x: jax.Array) -> jax.Array:
    """Identity that materializes a fresh output buffer (HBM-roofline copy)."""
    if x.size == 0 or x.ndim == 0:
        return jnp.copy(x)

    nbytes = x.size * jnp.dtype(x.dtype).itemsize
    lead = x.shape[0]

    # A handful of concurrent DMAs for large copies; a single DMA otherwise.
    # The DMA engine runs at the HBM copy roofline regardless of lane layout,
    # so no lane-dense reshaping is needed (and no masked vst.msk ever occurs).
    if nbytes >= (8 << 20) and lead >= 2:
        n_chunks = min(4, lead)
    else:
        n_chunks = 1

    # Static, roughly equal chunk boundaries along the leading axis.
    bounds = sorted(set(round(i * lead / n_chunks) for i in range(n_chunks + 1)))
    kernel, n = _make_hbm_copy_kernel(bounds)

    return pl.pallas_call(
        kernel,
        out_shape=jax.ShapeDtypeStruct(x.shape, x.dtype),
        in_specs=[pl.BlockSpec(memory_space=pl.ANY)],
        out_specs=pl.BlockSpec(memory_space=pl.ANY),
        scratch_shapes=[pltpu.SemaphoreType.DMA((n,))],
    )(x)


if __name__ == "__main__":
    key = jax.random.PRNGKey(0)
    x = jax.random.normal(key, (2, 4, 16, 16), dtype=jnp.float32)  # NCHW

    # Primary path: identity == no kernel at all.
    y = identity(x)
    y = jax.block_until_ready(y)
    assert y.shape == x.shape, (y.shape, x.shape)
    assert y.dtype == x.dtype, (y.dtype, x.dtype)
    assert bool(jnp.array_equal(y, x)), "Identity output mismatch"

    # Aliased Pallas pass-through.
    y1 = identity_aliased(x)
    y1 = jax.block_until_ready(y1)
    assert y1.shape == x.shape, (y1.shape, x.shape)
    assert y1.dtype == x.dtype, (y1.dtype, x.dtype)
    assert bool(jnp.array_equal(y1, x)), "Identity (aliased) output mismatch"

    # Fresh-buffer copy via direct HBM->HBM DMA.
    y2 = identity_copy(x)
    y2 = jax.block_until_ready(y2)
    assert y2.shape == x.shape, (y2.shape, x.shape)
    assert y2.dtype == x.dtype, (y2.dtype, x.dtype)
    assert bool(jnp.array_equal(y2, x)), "Identity (copy) output mismatch"

    print("KERNEL_OK")
</pallas_src>

<mosaic_0001>
module attributes {stable_mosaic.version = 11 : i64} {
  func.func @_identity_alias_kernel(%arg0: memref<2x4x16x16xf32, #tpu.memory_space<any>>, %arg1: memref<2x4x16x16xf32, #tpu.memory_space<any>>) attributes {dimension_semantics = [], scalar_prefetch = 0 : i64, scratch_operands = 0 : i64, tpu.core_type = #tpu.core_type<tc>} {
    return
  }
}

</mosaic_0001>

<llo_original>
// kernel: tpu_custom_call.1
$region0: #{tpu_custom_call.1}
  #allocation0 [shape = 'u32[]', space=smem, size = 0x4, offset = 0x4, fixed_abs, tag = 'smem constant byte address 0x4 - core index']
  #allocation1 [shape = 'u32[72,128]{1,0:T(1,128)}', space=vmem, size = 0x9000, scoped, tag = 'internal scratch']
  %s0 = inlined_call_operand.hbm [shape: f32[2,4,16,16], index: 0, kind: input, shape index: {}, may-alias: {0,1}]
  %s1 = inlined_call_operand.hbm [shape: f32[2,4,16,16], index: 1, kind: output, shape index: {}, may-alias: {0,1}]
  %s2 = sld [smem:[#allocation0]]
  $region2: #{tpu_custom_call.1} parent=0
    _
  %s4 = ssub.s32 1, %s2
  %s5 = scalar_select 0, %s4, %s2

</llo_original>
